<compile_context>
chip_gen: v5e
topology: v5e:2x2
jax: 0.10.0
libtpu: 0.0.40
codegen_flags: <defaults>
</compile_context>

<pallas_src>
import jax
import jax.numpy as jnp
from jax import lax
from jax.experimental import pallas as pl
from jax.experimental.pallas import tpu as pltpu


_VMEM_LIMIT_BYTES = 48 << 20  # explicit scoped-VMEM limit (> v5e 16 MiB default,
                              # < v7x 64 MiB physical, fine on v6e 128 MiB)


def _attn_loss_tile_kernel(logits_ref, labels_ref, out_ref):
    """One row-tile: fused log-softmax + label pick + masked partial sums.

    logits_ref: (R, C) VMEM block, native dtype (last block may contain
                out-of-bounds garbage rows -- their labels are -1).
    labels_ref: (R, 1) int32 VMEM block; label == -1 marks invalid/padded rows.
    out_ref:    (1, 2, 128) f32 block; sublane 0 = partial NLL sum,
                sublane 1 = partial valid-token count (broadcast across lanes).
    """
    x_native = logits_ref[...]                                    # (R, C) native
    labels = labels_ref[...]                                      # (R, 1) int32

    # Row max in native dtype (packed VPU for bf16); the single f32 up-cast is
    # fused into the subtract, so only one full-width f32 temp materializes.
    m = jnp.max(x_native, axis=-1, keepdims=True)                 # (R, 1) native
    shifted = x_native.astype(jnp.float32) - m.astype(jnp.float32)  # (R, C) f32

    # (1, C) iota broadcast against (R, 1) labels -- no (R, C) int32 temp.
    c_idx = lax.broadcasted_iota(jnp.int32, (1, shifted.shape[-1]), 1)
    onehot = c_idx == labels                                      # (R, C) bool
    picked = jnp.sum(jnp.where(onehot, shifted, 0.0),
                     axis=-1, keepdims=True)                      # (R, 1)
    denom = jnp.sum(jnp.exp(shifted), axis=-1, keepdims=True)     # (R, 1)
    nll = jnp.log(denom) - picked                                 # (R, 1)

    # Select (not multiply) so NaN/Inf from garbage OOB rows cannot propagate.
    valid = labels >= 0                                           # (R, 1) bool
    total = jnp.sum(jnp.where(valid, nll, 0.0))                   # scalar
    count = jnp.sum(valid.astype(jnp.float32))                    # scalar

    # Lane-dense full-block store: sublane 0 carries `total`, sublane 1 `count`.
    sub = lax.broadcasted_iota(jnp.int32, (1, 2, 128), 1)
    out_ref[...] = jnp.where(sub == 0, total, count)


def _round_up(x, m):
    return -(-x // m) * m


def _choose_row_tile(rows, num_classes, itemsize):
    """Pick the row tile by per-step VMEM bytes, not a fixed row cap.

    Per-row cost budget: 2x-buffered native-dtype input block plus roughly
    three full-width f32 temporaries inside the body.  ~24 MiB/step keeps the
    total comfortably under the 48 MiB scoped limit we request (and under
    v7x's 64 MiB physical VMEM); on v5e/v6e it is trivially safe.
    """
    budget = 24 << 20
    per_row = num_classes * (2 * itemsize + 3 * 4)
    rt = max(8, budget // max(per_row, 1))
    rt = min(rt, _round_up(rows, 8))
    # Prefer >= 2 grid steps so the ("parallel",) axis can split across both
    # v7x TensorCores (and DMA overlaps compute).
    if rows >= 16:
        rt = min(rt, _round_up(-(-rows // 2), 8))
    rt = max(8, (rt // 8) * 8)
    return int(rt)


def attn_losses(pt_logits, gt_labels, gt_lengths):
    """Pallas equivalent of AttnLosses.forward.

    PyTorch semantics: flatten each sequence to its valid length, concat, then
    nn.CrossEntropyLoss (mean of -log_softmax(logits)[label] over valid tokens).
    """
    B, T, C = pt_logits.shape
    rows = B * T

    # Bake validity into the labels: token t of sequence b is valid iff
    # t < gt_lengths[b]; invalid / padded rows get label -1.
    t_idx = jnp.arange(T, dtype=jnp.int32)[None, :]
    valid = t_idx < gt_lengths.astype(jnp.int32)[:, None]          # (B, T)
    labels = jnp.where(valid, gt_labels.astype(jnp.int32), -1)     # (B, T)

    flat_logits = pt_logits.reshape(rows, C)   # native dtype, NO pad copy
    flat_labels = labels.reshape(rows, 1)

    row_tile = _choose_row_tile(rows, C, flat_logits.dtype.itemsize)
    num_tiles = -(-rows // row_tile)
    rows_padded = num_tiles * row_tile

    # Only the tiny labels array is padded; the ragged last logits block is
    # read as a partial block and its garbage rows carry label -1.
    pad = rows_padded - rows
    if pad:
        flat_labels = jnp.pad(flat_labels, ((0, pad), (0, 0)),
                              constant_values=-1)

    partials = pl.pallas_call(
        _attn_loss_tile_kernel,
        out_shape=jax.ShapeDtypeStruct((num_tiles, 2, 128), jnp.float32),
        grid=(num_tiles,),
        in_specs=[
            pl.BlockSpec((row_tile, C), lambda i: (i, 0)),
            pl.BlockSpec((row_tile, 1), lambda i: (i, 0)),
        ],
        out_specs=pl.BlockSpec((1, 2, 128), lambda i: (i, 0, 0)),
        compiler_params=pltpu.CompilerParams(
            dimension_semantics=("parallel",),
            vmem_limit_bytes=_VMEM_LIMIT_BYTES),
    )(flat_logits, flat_labels)

    total = jnp.sum(partials[:, 0, 0])
    count = jnp.sum(partials[:, 1, 0])
    # NOTE: count == 0 (all gt_lengths zero) yields NaN, matching both the pure
    # JAX reference and torch.nn.CrossEntropyLoss on an empty batch.
    return total / count


def _reference(pt_logits, gt_labels, gt_lengths):
    # Pure-JAX reference mirroring torch's flatten + CrossEntropyLoss(mean).
    B, T, C = pt_logits.shape
    logits = pt_logits.astype(jnp.float32)
    logZ = jax.scipy.special.logsumexp(logits, axis=-1)                  # (B, T)
    picked = jnp.take_along_axis(logits, gt_labels[..., None], axis=-1)[..., 0]
    nll = logZ - picked
    mask = (jnp.arange(T)[None, :] < gt_lengths[:, None]).astype(jnp.float32)
    return jnp.sum(nll * mask) / jnp.sum(mask)


if __name__ == "__main__":
    key = jax.random.PRNGKey(0)

    # Case 1: small canonical shapes (rows divide evenly into 2 tiles).
    k1, k2, k3, k4 = jax.random.split(key, 4)
    B, T, C = 2, 8, 32
    pt_logits = jax.random.normal(k1, (B, T, C), dtype=jnp.float32)
    gt_labels = jax.random.randint(k2, (B, T), 0, C, dtype=jnp.int32)
    gt_lengths = jnp.array([5, 8], dtype=jnp.int32)

    loss = jax.block_until_ready(attn_losses(pt_logits, gt_labels, gt_lengths))
    ref = _reference(pt_logits, gt_labels, gt_lengths)
    assert jnp.allclose(loss, ref, rtol=1e-5, atol=1e-5), (loss, ref)

    # Case 2: ragged tail (rows % row_tile != 0) exercises the no-pad OOB path.
    B2, T2, C2 = 3, 12, 40
    pt_logits2 = jax.random.normal(k3, (B2, T2, C2), dtype=jnp.float32)
    gt_labels2 = jax.random.randint(k4, (B2, T2), 0, C2, dtype=jnp.int32)
    gt_lengths2 = jnp.array([12, 7, 3], dtype=jnp.int32)

    loss2 = jax.block_until_ready(attn_losses(pt_logits2, gt_labels2, gt_lengths2))
    ref2 = _reference(pt_logits2, gt_labels2, gt_lengths2)
    assert jnp.allclose(loss2, ref2, rtol=1e-5, atol=1e-5), (loss2, ref2)

    print("KERNEL_OK")
</pallas_src>

<mosaic_0001>
module attributes {stable_mosaic.version = 11 : i64} {
  func.func @_attn_loss_tile_kernel(%arg0: i32, %arg1: memref<8x32xf32, #tpu.memory_space<vmem>>, %arg2: memref<8x1xi32, #tpu.memory_space<vmem>>, %arg3: memref<1x2x128xf32, #tpu.memory_space<vmem>>) attributes {dimension_semantics = [#tpu.dimension_semantics<parallel>], iteration_bounds = array<i64: 2>, scalar_prefetch = 0 : i64, scratch_operands = 0 : i64, tpu.core_type = #tpu.core_type<tc>, window_params = [{transform_indices = @transform_0, window_bounds = array<i64: 8, 32>}, {transform_indices = @transform_1, window_bounds = array<i64: 8, 1>}, {transform_indices = @transform_2, window_bounds = array<i64: 1, 2, 128>}]} {
    %c0 = arith.constant 0 : index
    %c0_0 = arith.constant 0 : index
    %0 = vector.load %arg1[%c0, %c0_0] : memref<8x32xf32, #tpu.memory_space<vmem>>, vector<8x32xf32>
    %c0_1 = arith.constant 0 : index
    %c0_2 = arith.constant 0 : index
    %1 = vector.load %arg2[%c0_1, %c0_2] : memref<8x1xi32, #tpu.memory_space<vmem>>, vector<8x1xi32>
    %cst = arith.constant dense<0xFF800000> : vector<8xf32>
    %2 = vector.multi_reduction <maximumf>, %0, %cst [1] : vector<8x32xf32> to vector<8xf32>
    %3 = vector.shape_cast %2 : vector<8xf32> to vector<8x1xf32>
    %4 = vector.broadcast %3 : vector<8x1xf32> to vector<8x32xf32>
    %5 = arith.subf %0, %4 : vector<8x32xf32>
    %6 = tpu.iota {dimensions = array<i32: 1>} : vector<1x32xi32>
    %7 = vector.broadcast %6 : vector<1x32xi32> to vector<8x32xi32>
    %8 = vector.broadcast %1 : vector<8x1xi32> to vector<8x32xi32>
    %9 = arith.cmpi eq, %7, %8 : vector<8x32xi32>
    %cst_3 = arith.constant 0.000000e+00 : f32
    %10 = vector.broadcast %cst_3 : f32 to vector<8x32xf32>
    %11 = arith.select %9, %5, %10 : vector<8x32xi1>, vector<8x32xf32>
    %cst_4 = arith.constant dense<0.000000e+00> : vector<8xf32>
    %12 = vector.multi_reduction <add>, %11, %cst_4 [1] : vector<8x32xf32> to vector<8xf32>
    %13 = vector.shape_cast %12 : vector<8xf32> to vector<8x1xf32>
    %14 = math.exp %5 : vector<8x32xf32>
    %cst_5 = arith.constant dense<0.000000e+00> : vector<8xf32>
    %15 = vector.multi_reduction <add>, %14, %cst_5 [1] : vector<8x32xf32> to vector<8xf32>
    %16 = vector.shape_cast %15 : vector<8xf32> to vector<8x1xf32>
    %17 = math.log %16 : vector<8x1xf32>
    %18 = arith.subf %17, %13 : vector<8x1xf32>
    %c0_i32 = arith.constant 0 : i32
    %19 = vector.broadcast %c0_i32 : i32 to vector<8x1xi32>
    %20 = arith.cmpi sge, %1, %19 : vector<8x1xi32>
    %cst_6 = arith.constant 0.000000e+00 : f32
    %21 = vector.broadcast %cst_6 : f32 to vector<8x1xf32>
    %22 = arith.select %20, %18, %21 : vector<8x1xi1>, vector<8x1xf32>
    %23 = vector.shape_cast %22 : vector<8x1xf32> to vector<1x8x1xf32>
    %cst_7 = arith.constant dense<0.000000e+00> : vector<1xf32>
    %24 = vector.multi_reduction <add>, %23, %cst_7 [1, 2] : vector<1x8x1xf32> to vector<1xf32>
    %25 = vector.shape_cast %24 : vector<1xf32> to vector<1x1x1xf32>
    %26 = vector.extract %25[0, 0, 0] : f32 from vector<1x1x1xf32>
    %27 = arith.extui %20 : vector<8x1xi1> to vector<8x1xi32>
    %28 = arith.sitofp %27 : vector<8x1xi32> to vector<8x1xf32>
    %29 = vector.shape_cast %28 : vector<8x1xf32> to vector<1x8x1xf32>
    %cst_8 = arith.constant dense<0.000000e+00> : vector<1xf32>
    %30 = vector.multi_reduction <add>, %29, %cst_8 [1, 2] : vector<1x8x1xf32> to vector<1xf32>
    %31 = vector.shape_cast %30 : vector<1xf32> to vector<1x1x1xf32>
    %32 = vector.extract %31[0, 0, 0] : f32 from vector<1x1x1xf32>
    %33 = tpu.iota {dimensions = array<i32: 1>} : vector<1x2x128xi32>
    %c0_i32_9 = arith.constant 0 : i32
    %34 = vector.broadcast %c0_i32_9 : i32 to vector<1x2x128xi32>
    %35 = arith.cmpi eq, %33, %34 : vector<1x2x128xi32>
    %36 = vector.broadcast %26 : f32 to vector<1x2x128xf32>
    %37 = vector.broadcast %32 : f32 to vector<1x2x128xf32>
    %38 = arith.select %35, %36, %37 : vector<1x2x128xi1>, vector<1x2x128xf32>
    %c0_10 = arith.constant 0 : index
    %c0_11 = arith.constant 0 : index
    %c0_12 = arith.constant 0 : index
    %39 = vector.load %arg3[%c0_10, %c0_11, %c0_12] : memref<1x2x128xf32, #tpu.memory_space<vmem>>, vector<1x2x128xf32>
    tpu.vector_store %arg3[%c0_10, %c0_11, %c0_12], %38 {strides = array<i32>} : memref<1x2x128xf32, #tpu.memory_space<vmem>>, vector<1x2x128xf32>,
    return
  }
  func.func @transform_0(%arg0: i32) -> (i32, i32) {
    %c0_i32 = arith.constant 0 : i32
    %c0_i32_0 = arith.constant 0 : i32
    return %arg0, %c0_i32 : i32, i32
  }
  func.func @transform_1(%arg0: i32) -> (i32, i32) {
    %c0_i32 = arith.constant 0 : i32
    %c0_i32_0 = arith.constant 0 : i32
    return %arg0, %c0_i32 : i32, i32
  }
  func.func @transform_2(%arg0: i32) -> (i32, i32, i32) {
    %c0_i32 = arith.constant 0 : i32
    %c0_i32_0 = arith.constant 0 : i32
    %c0_i32_1 = arith.constant 0 : i32
    return %arg0, %c0_i32, %c0_i32_0 : i32, i32, i32
  }
}

</mosaic_0001>

<llo_original>
// kernel: tpu_custom_call.1
$region0: #{tpu_custom_call.1}
  #allocation0 [shape = 'u32[]', space=smem, size = 0x4, offset = 0x4, fixed_abs, tag = 'smem constant byte address 0x4 - core index']
  #allocation1 [shape = 'u32[72,128]{1,0:T(1,128)}', space=vmem, size = 0x9000, scoped, tag = 'internal scratch']
  %s0 = inlined_call_operand.vmem [shape: f32[16,32], index: 0, kind: input, shape index: {}]
  %s1 = inlined_call_operand.vmem [shape: s32[16,1], index: 1, kind: input, shape index: {}]
  %s2 = inlined_call_operand.hbm [shape: f32[2,2,128], index: 2, kind: output, shape index: {}]
  %s3 = sld [smem:[#allocation0]]
  $region41: #{tpu_custom_call.1} parent=0
    _
  %s5 = ssub.s32 1, %s3
  %s6 = scalar_select 0, %s5, %s3
  $region1: #{tpu_custom_call.1} parent=0
    #allocation2 [shape = 'u8[2048]{0}', space=vmem, size = 0x800, scoped, tag = 'output window, operand 0']
    #allocation3 [shape = 's32[2]{0}', space=sflag, size = 0x8, scoped, tag = 'scoped memory for tpu_custom_call.1']
    %7 = vsyncpa [#allocation3], 0
    %s8 = scalar_lea.sflag [#allocation3], 1
    %9 = vsyncpa %s8, 0
    loop: start=0, step=1, limit=4
    $region2: #{tpu_custom_call.1} parent=1 // loop_pre_header
      _
    $region3: #{tpu_custom_call.1} parent=1 // loop_header
      %s11 = sphi 0, %s15
      %p12 = scmp.ge.s32.totalorder %s11, 4
      %s21 = sphi 0, %s23
      %s24 = sphi 0, %s21
      %s25 = sphi 0, %s24
      %s41 = sphi 0, %s25
      %s47 = sphi 0, %s49
      %s50 = sphi 0, %s47
      %s51 = sphi 0, %s50
      %s67 = sphi 0, %s51
      %s73 = sphi 0, %s75
      %s76 = sphi 0, %s73
      %s77 = sphi 0, %s76
      %s93 = sphi 0, %s77
    $region4: #{tpu_custom_call.1} parent=1 // loop_header_branch
      %14 = sbr.rel (%p12) target = $region8
    $region5: #{tpu_custom_call.1} parent=1 // loop_body
      %s16 = ssub.s32 %s11, 1
      %s17 = ssub.s32 %s11, 2
      %s18 = sadd.s32 %s11, 1
      %s19 = ssub.s32 %s11, %s18
      %p20 = scmp.eq.s32.totalorder %s19, 0
      %s22 = sadd.s32 %s21, 1
      %s23 = scalar_select %p20, %s21, %s22
      %p26 = pneg %p20
      %p27 = scmp.eq.s32.totalorder %s11, 1
      %p28 = por %p26, %p27
      %p29 = scmp.ne.s32.totalorder %s21, %s24
      %p30 = scmp.eq.s32.totalorder %s11, 0
      %p31 = por %p29, %p30
      %p32 = scmp.ne.s32.totalorder %s21, %s24
      %p33 = scmp.eq.s32.totalorder %s16, 1
      %p34 = por %p32, %p33
      %p35 = scmp.ne.s32.totalorder %s24, %s25
      %p36 = scmp.eq.s32.totalorder %s16, 0
      %p37 = por %p35, %p36
      %p38 = scmp.ne.s32.totalorder %s24, %s25
      %p39 = scmp.eq.s32.totalorder %s17, 1
      %p40 = por %p38, %p39
      %p42 = scmp.ne.s32.totalorder %s25, %s41
      %p43 = scmp.eq.s32.totalorder %s17, 0
      %p44 = por %p42, %p43
      %s45 = ssub.s32 %s11, %s18
      %p46 = scmp.eq.s32.totalorder %s45, 0
      %s48 = sadd.s32 %s47, 1
      %s49 = scalar_select %p46, %s47, %s48
      %p52 = pneg %p46
      %p53 = scmp.eq.s32.totalorder %s11, 1
      %p54 = por %p52, %p53
      %p55 = scmp.ne.s32.totalorder %s47, %s50
      %p56 = scmp.eq.s32.totalorder %s11, 0
      %p57 = por %p55, %p56
      %p58 = scmp.ne.s32.totalorder %s47, %s50
      %p59 = scmp.eq.s32.totalorder %s16, 1
      %p60 = por %p58, %p59
      %p61 = scmp.ne.s32.totalorder %s50, %s51
      %p62 = scmp.eq.s32.totalorder %s16, 0
      %p63 = por %p61, %p62
      %p64 = scmp.ne.s32.totalorder %s50, %s51
      %p65 = scmp.eq.s32.totalorder %s17, 1
      %p66 = por %p64, %p65
      %p68 = scmp.ne.s32.totalorder %s51, %s67
      %p69 = scmp.eq.s32.totalorder %s17, 0
      %p70 = por %p68, %p69
      %s71 = ssub.s32 %s11, %s18
      %p72 = scmp.eq.s32.totalorder %s71, 0
      %s74 = sadd.s32 %s73, 1
      %s75 = scalar_select %p72, %s73, %s74
      %p78 = pneg %p72
      %p79 = scmp.eq.s32.totalorder %s11, 1
      %p80 = por %p78, %p79
      %p81 = scmp.ne.s32.totalorder %s73, %s76
      %p82 = scmp.eq.s32.totalorder %s11, 0
      %p83 = por %p81, %p82
      %p84 = scmp.ne.s32.totalorder %s73, %s76
      %p85 = scmp.eq.s32.totalorder %s16, 1
      %p86 = por %p84, %p85
      %p87 = scmp.ne.s32.totalorder %s76, %s77
      %p88 = scmp.eq.s32.totalorder %s16, 0
      %p89 = por %p87, %p88
      %p90 = scmp.ne.s32.totalorder %s76, %s77
      %p91 = scmp.eq.s32.totalorder %s17, 1
      %p92 = por %p90, %p91
      %p94 = scmp.ne.s32.totalorder %s77, %s93
      %p95 = scmp.eq.s32.totalorder %s17, 0
      %p96 = por %p94, %p95
      %p97 = scmp.le.s32.totalorder 1, %s11
      %p98 = scmp.lt.s32.totalorder %s11, 3
      %p99 = pnand %p97, %p98
      %p100 = pneg %p99
      // Predicated region
      $region9: #{tpu_custom_call.1} parent=5 // pred_check
        _
      $region10: #{tpu_custom_call.1} parent=5 // pred_check_branch
        %102 = sbr.rel (%p99) target = $region12
      $region11: #{tpu_custom_call.1} parent=5 // pred_region
        %s103 = ssub.s32 %s11, 1
      $region12: #{tpu_custom_call.1} parent=5 // pred_fallthru
        _
      %p104 = scmp.lt.s32.totalorder %s11, 2
      // Predicated region
      $region13: #{tpu_custom_call.1} parent=5 // pred_check
        %p105 = pneg %p104
      $region14: #{tpu_custom_call.1} parent=5 // pred_check_branch
        %107 = sbr.rel (%p105) target = $region16
      $region15: #{tpu_custom_call.1} parent=5 // pred_region
        // Predicated region
        $region17: #{tpu_custom_call.1} parent=15 // pred_check
          %p108 = pneg %p31
        $region18: #{tpu_custom_call.1} parent=15 // pred_check_branch
          %110 = sbr.rel (%p108) target = $region20
        $region19: #{tpu_custom_call.1} parent=15 // pred_region
          %p111 = scmp.lt.s32.totalorder %s11, 1
          %s112 = scalar_select %p111, %s11, 1
          %s113 = smul.addr %s112, 8
          %s114 = scalar_lea.vmem %s0, %s113
        $region20: #{tpu_custom_call.1} parent=15 // pred_fallthru
          _
        // Predicated region
        $region21: #{tpu_custom_call.1} parent=15 // pred_check
          %p115 = pneg %p57
        $region22: #{tpu_custom_call.1} parent=15 // pred_check_branch
          %117 = sbr.rel (%p115) target = $region24
        $region23: #{tpu_custom_call.1} parent=15 // pred_region
          %p118 = scmp.lt.s32.totalorder %s11, 1
          %s119 = scalar_select %p118, %s11, 1
          %s120 = smul.addr %s119, 8
          %s121 = scalar_lea.vmem %s1, %s120
        $region24: #{tpu_custom_call.1} parent=15 // pred_fallthru
          _
      $region16: #{tpu_custom_call.1} parent=5 // pred_fallthru
        _
      %p122 = scmp.le.s32.totalorder 1, %s11
      %p123 = scmp.lt.s32.totalorder %s11, 3
      %p124 = pnand %p122, %p123
      %p125 = pneg %p124
      // Predicated region
      $region25: #{tpu_custom_call.1} parent=5 // pred_check
        _
      $region26: #{tpu_custom_call.1} parent=5 // pred_check_branch
        %127 = sbr.rel (%p124) target = $region28
      $region27: #{tpu_custom_call.1} parent=5 // pred_region
        %s128 = ssub.s32 %s11, 1
        %p129 = scmp.lt.s32.totalorder %s16, 1
        %s130 = scalar_select %p129, %s16, 1
        %s131 = smul.addr %s130, 8
        %s132 = scalar_lea.vmem %s0, %s131
        %p133 = pneg %p37
        %p134 = pneg %p34
        %p135 = scmp.lt.s32.totalorder %s16, 1
        %s136 = scalar_select %p135, %s16, 1
        %s137 = smul.addr %s136, 8
        %s138 = scalar_lea.vmem %s1, %s137
        %p139 = pneg %p63
        %p140 = pneg %p60
        %p141 = pneg %p89
        %p142 = pneg %p86
        %s143 = sand.u32 %s76, 1
        %s144 = scalar_lea.sflag [#allocation3], %s143
        %s145 = sand.u32 %s76, 1
        %s146 = smul.addr %s145, 2
        %s147 = scalar_lea.vmem [#allocation2], %s146
        %p148 = scmp.lt.s32.totalorder %s16, 1
        %s149 = scalar_select %p148, %s16, 1
        %s150 = smul.addr %s149, 8
        %s151 = scalar_lea.vmem %s0, %s150
        %p152 = scmp.lt.s32.totalorder %s16, 1
        %s153 = scalar_select %p152, %s16, 1
        %s154 = smul.addr %s153, 8
        %s155 = scalar_lea.vmem %s1, %s154
        %v156 = vld [vmem:[%s151] sm:$0xff]
        %v157 = vld [vmem:[%s155] sm:$0xff]
        %vm158 = vcmask 261120
        %v159 = vsel %vm158, %v156, -inf
        %160 = vmax.xlane.f32.xlu0 %v159
        %v161 = vpop.xlane.xlu0 %160
        %v162 = vsub.f32 %v156, %v161
        %v163 = vlaneseq
        %v164 = vand.u32 %v163, 127
        %165 = vset.pattern.permute.xlu0 0
        %166 = vperm.xlu0 %165, %v157
        %v167 = vpop.permute.xlu0 %166
        %vm168 = vcmp.eq.s32.totalorder %v164, %v167
        %v169 = vsel %vm168, %v162, 0.0
        %v170 = vsel %vm158, %v169, 0.0
        %171 = vadd.xlane.f32.xlu0 %v170
        %v172 = vpop.xlane.xlu0 %171
        %v173 = vmul.f32 %v162, 1.442695
        %v174 = vpow.pop %v173
        %v175 = vsel %vm158, %v174, 0.0
        %176 = vadd.xlane.f32.xlu0 %v175
        %v177 = vpop.xlane.xlu0 %176
        %v178 = vlog2.pop %v177
        %v179 = vmul.f32 %v178, 0.6931472
        %v180 = vsub.f32 %v179, %v172
        %vm181 = vcmp.ge.s32.totalorder %v157, 0
        %v182 = vsel %vm181, %v180, 0.0
        %vm183 = vcmask 7168
        %v184 = vsel %vm183, %v182, 0.0
        %185 = vadd.xlane.f32.xlu0 %v184
        %v186 = vpop.xlane.xlu0 %185
        %v187 = vrot.slane %v186, 4
        %v188 = vadd.f32 %v186, %v187
        %v189 = vrot.slane %v188, 2
        %v190 = vadd.f32 %v188, %v189
        %v191 = vrot.slane %v190, 1
        %v192 = vadd.f32 %v190, %v191
        %s193 = vtos %v192
        %v194 = vsel %vm181, 1, 0
        %v195 = vcvt.s32.f32 %v194
        %v196 = vsel %vm183, %v195, 0.0
        %197 = vadd.xlane.f32.xlu0 %v196
        %v198 = vpop.xlane.xlu0 %197
        %v199 = vrot.slane %v198, 4
        %v200 = vadd.f32 %v198, %v199
        %v201 = vrot.slane %v200, 2
        %v202 = vadd.f32 %v200, %v201
        %v203 = vrot.slane %v202, 1
        %v204 = vadd.f32 %v202, %v203
        %s205 = vtos %v204
        %v206 = vlaneseq
        %v207 = vshrl.u32 %v206, 7
        %vm208 = vcmp.eq.s32.totalorder %v207, 0
        %v209 = vstv %s193
        %v210 = vstv %s205
        %v211 = vsel %vm208, %v209, %v210
        %212 = vst [vmem:[%s147] sm:$0x3] %v211
        %s213 = sand.u32 %s76, 1
        %s214 = scalar_lea.sflag [#allocation3], %s213
        %s215 = sand.u32 %s76, 1
        %s216 = smul.addr %s215, 2
        %s217 = scalar_lea.vmem [#allocation2], %s216
        // Predicated region
        $region29: #{tpu_custom_call.1} parent=27 // pred_check
          %p218 = pneg %p86
        $region30: #{tpu_custom_call.1} parent=27 // pred_check_branch
          %220 = sbr.rel (%p218) target = $region32
        $region31: #{tpu_custom_call.1} parent=27 // pred_region
          %222 = vsyncadd %s214, 0
          %s223 = smul.addr %s16, 2
          %s224 = scalar_lea.hbm %s2, %s223
          %s226 = sshll.u32 %s217, 4
          %s227 = int_to_ptr.vmem [resolvable:$true] %s226
          %s228 = sshll.u32 %s224, 4
          %s229 = int_to_ptr.hbm [resolvable:$true] %s228
          %231 = dma.vmem_to_hbm [thread:$0]  %s227, 32, %s229, %s214
        $region32: #{tpu_custom_call.1} parent=27 // pred_fallthru
          _
      $region28: #{tpu_custom_call.1} parent=5 // pred_fallthru
        _
      %p232 = scmp.le.s32.totalorder 2, %s11
      // Predicated region
      $region33: #{tpu_custom_call.1} parent=5 // pred_check
        %p233 = pneg %p232
      $region34: #{tpu_custom_call.1} parent=5 // pred_check_branch
        %235 = sbr.rel (%p233) target = $region36
      $region35: #{tpu_custom_call.1} parent=5 // pred_region
        %s236 = ssub.s32 %s11, 2
        // Predicated region
        $region37: #{tpu_custom_call.1} parent=35 // pred_check
          %p237 = pneg %p92
        $region38: #{tpu_custom_call.1} parent=35 // pred_check_branch
          %239 = sbr.rel (%p237) target = $region40
        $region39: #{tpu_custom_call.1} parent=35 // pred_region
          %s240 = sand.u32 %s77, 1
          %s241 = scalar_lea.sflag [#allocation3], %s240
          %s242 = sand.u32 %s77, 1
          %s243 = smul.addr %s242, 2
          %s244 = scalar_lea.vmem [#allocation2], %s243
          %246 = dma.done %s241, 32
        $region40: #{tpu_custom_call.1} parent=35 // pred_fallthru
          _
      $region36: #{tpu_custom_call.1} parent=5 // pred_fallthru
        _
    $region6: #{tpu_custom_call.1} parent=1 // loop_footer
      %s15 = sadd.s32 1, %s11
    $region7: #{tpu_custom_call.1} parent=1 // loop_footer_branch
      %10 = sbr.rel target = $region3
    $region8: #{tpu_custom_call.1} parent=1 // loop_exit
      _
    %247 = vsyncpa [#allocation3], 1
    %s248 = scalar_lea.sflag [#allocation3], 1
    %249 = vsyncpa %s248, 1

</llo_original>
